<compile_context>
chip_gen: v5e
topology: v5e:2x2
jax: 0.10.0
libtpu: 0.0.40
codegen_flags: <defaults>
</compile_context>

<pallas_src>
import jax
import jax.numpy as jnp
from jax.experimental import pallas as pl
from jax.experimental.pallas import tpu as pltpu


# ---------------------------------------------------------------------------
# Kernel body: pure elementwise max(x, 0) on the whole VMEM tile (VPU work).
# ---------------------------------------------------------------------------
def _relu_kernel(x_ref, o_ref):
    o_ref[...] = jnp.maximum(x_ref[...], jnp.zeros((), dtype=x_ref.dtype))


# ---------------------------------------------------------------------------
# Planning helpers (pure Python, run at trace time in the wrapper).
# ---------------------------------------------------------------------------
_LANE_CANDIDATES = (8192, 4096, 2048, 1024, 512, 256, 128)


def _sublane_align(itemsize: int) -> int:
    # Sub-32-bit dtypes pack along sublanes: f32 -> 8, bf16 -> 16, int8/fp8 -> 32.
    return {4: 8, 2: 16, 1: 32}.get(itemsize, 8)


def _tpu_hints():
    """Best-effort hardware hints: (per-core VMEM bytes, likely multi-TC chip)."""
    try:
        info = pltpu.get_tpu_info()
        vmem = int(info.vmem_capacity_bytes)
        # v7x exposes ~64 MiB VMEM per TensorCore and is the only listed
        # generation with 2 TCs per chip.
        return vmem, vmem <= 96 * 1024 * 1024
    except Exception:
        return 128 * 1024 * 1024, False


def _plan_2d(total: int, itemsize: int, align: int, block_budget: int):
    """Pick a lane-dense 2-D slab (rows, cols) for `total` flattened elements.

    Returns (pad_elems, rows, cols) where pad_elems elements of zero padding
    are appended to the flattened array before reshaping.
    """
    # 1) Clean reshape with aligned rows (tileable): prefer widest lanes.
    for lanes in _LANE_CANDIDATES:
        if total % lanes == 0 and (total // lanes) % align == 0:
            return 0, total // lanes, lanes
    # 2) Clean reshape with unaligned rows: only safe as a single full-array
    #    block, so require it to fit the per-block budget.
    if total * itemsize <= block_budget:
        for lanes in _LANE_CANDIDATES:
            if total % lanes == 0:
                return 0, total // lanes, lanes
    # 3) Fallback: pad up to a lane-dense, row-aligned slab and slice after.
    lanes = 1024 if total >= 1024 else 128
    chunk = align * lanes
    padded = ((total + chunk - 1) // chunk) * chunk
    return padded - total, padded // lanes, lanes


def _pick_tile_rows(rows: int, cols: int, itemsize: int, align: int,
                    block_budget: int, want_split: bool) -> int:
    """Largest multiple-of-`align` divisor of `rows` whose block fits the
    budget; prefers an even, >=2 step count when `want_split` (multi-TC)."""
    row_bytes = cols * itemsize
    full_bytes = rows * row_bytes

    if full_bytes <= block_budget and not want_split:
        return rows  # single block (block == full array, no (8,128) rule)

    if rows % align != 0:
        # No aligned divisor exists; only reachable when the full array fits
        # the budget (see _plan_2d), so fall back to a single block.
        return rows

    d_max = min(rows, max(align, block_budget // max(row_bytes, 1)))
    best = None  # (meets_split_preference, tile_rows)
    d = align
    while d <= d_max:
        if rows % d == 0 and d * row_bytes <= block_budget:
            steps = rows // d
            pref_ok = (steps >= 2 and steps % 2 == 0) if want_split else True
            cand = (pref_ok, d)
            if best is None or cand > best:
                best = cand
        d += align
    if best is None:
        return rows  # pathological; minimal aligned tile always fits in practice
    return best[1]


# ---------------------------------------------------------------------------
# Public wrapper.
# ---------------------------------------------------------------------------
def relu_pallas(x: jax.Array) -> jax.Array:
    """ReLU over an arbitrary-shape tensor, computed in a Pallas TPU kernel."""
    orig_shape = x.shape
    dtype = x.dtype
    total = int(x.size)
    if total == 0:
        return x

    itemsize = jnp.dtype(dtype).itemsize
    align = _sublane_align(itemsize)

    _, multi_tc = _tpu_hints()
    # 8 MiB blocks keep the worst-case double-buffered in+out footprint at
    # 32 MiB, safe on every generation; raise scoped VMEM explicitly to 48 MiB
    # (> v5e's 16 MiB default, < v7x's 64 MiB physical).
    block_budget = 8 * 1024 * 1024
    vmem_limit = 48 * 1024 * 1024

    pad_elems, rows, cols = _plan_2d(total, itemsize, align, block_budget)

    xf = x.reshape(-1)
    if pad_elems:
        xf = jnp.pad(xf, (0, pad_elems))  # cheap wrapper-side copy; relu(0)=0
    x2d = xf.reshape(rows, cols)

    # Force an even >=2-step grid on detected multi-TC chips for multi-MiB
    # tensors so both TensorCores' DMA paths engage; otherwise only tile when
    # the tensor exceeds the per-block budget.
    tensor_bytes = rows * cols * itemsize
    want_split = multi_tc and tensor_bytes > (2 * 1024 * 1024)

    tile_rows = _pick_tile_rows(rows, cols, itemsize, align,
                                block_budget, want_split)
    grid = (rows // tile_rows,)

    out2d = pl.pallas_call(
        _relu_kernel,
        out_shape=jax.ShapeDtypeStruct((rows, cols), dtype),
        grid_spec=pltpu.PrefetchScalarGridSpec(
            num_scalar_prefetch=0,
            grid=grid,
            in_specs=[pl.BlockSpec((tile_rows, cols), lambda i: (i, 0))],
            out_specs=pl.BlockSpec((tile_rows, cols), lambda i: (i, 0)),
        ),
        # In-place on the HBM buffer (matches PyTorch inplace=True); XLA
        # inserts a copy if the input is not donatable.
        input_output_aliases={0: 0},
        compiler_params=pltpu.CompilerParams(
            dimension_semantics=("parallel",),
            vmem_limit_bytes=vmem_limit,
        ),
        cost_estimate=pl.CostEstimate(
            flops=total,
            transcendentals=0,
            bytes_accessed=2 * total * itemsize,
        ),
    )(x2d)

    outf = out2d.reshape(-1)
    if pad_elems:
        outf = outf[:total]
    return outf.reshape(orig_shape)


if __name__ == "__main__":
    key = jax.random.PRNGKey(0)

    # Small-but-representative NCHW input (module's original is 1x1024x14x14).
    x = jax.random.normal(key, (2, 4, 16, 16), dtype=jnp.float32)
    y = relu_pallas(x)
    jax.block_until_ready(y)
    y_ref = jnp.maximum(x, 0.0)
    assert y.shape == x.shape and y.dtype == x.dtype
    assert jnp.allclose(y, y_ref)

    # Also exercise the non-128-divisible padding path once for robustness.
    x_odd = jax.random.normal(jax.random.PRNGKey(1), (1, 3, 5, 5),
                              dtype=jnp.float32)
    y_odd = relu_pallas(x_odd)
    jax.block_until_ready(y_odd)
    assert y_odd.shape == x_odd.shape
    assert jnp.allclose(y_odd, jnp.maximum(x_odd, 0.0))

    print("KERNEL_OK")
</pallas_src>

<mosaic_0001>
module attributes {stable_mosaic.version = 11 : i64} {
  func.func @_relu_kernel(%arg0: i32, %arg1: memref<8x256xf32, #tpu.memory_space<vmem>>, %arg2: memref<8x256xf32, #tpu.memory_space<vmem>>) attributes {dimension_semantics = [#tpu.dimension_semantics<parallel>], iteration_bounds = array<i64: 1>, scalar_prefetch = 0 : i64, scratch_operands = 0 : i64, tpu.core_type = #tpu.core_type<tc>, window_params = [{transform_indices = @transform_0, window_bounds = array<i64: 8, 256>}, {transform_indices = @transform_1, window_bounds = array<i64: 8, 256>}]} {
    %c0 = arith.constant 0 : index
    %c0_0 = arith.constant 0 : index
    %0 = vector.load %arg1[%c0, %c0_0] : memref<8x256xf32, #tpu.memory_space<vmem>>, vector<8x256xf32>
    %cst = arith.constant 0.000000e+00 : f32
    %1 = vector.broadcast %cst : f32 to vector<8x256xf32>
    %2 = arith.maximumf %0, %1 : vector<8x256xf32>
    %c0_1 = arith.constant 0 : index
    %c0_2 = arith.constant 0 : index
    %3 = vector.load %arg2[%c0_1, %c0_2] : memref<8x256xf32, #tpu.memory_space<vmem>>, vector<8x256xf32>
    tpu.vector_store %arg2[%c0_1, %c0_2], %2 {strides = array<i32>} : memref<8x256xf32, #tpu.memory_space<vmem>>, vector<8x256xf32>,
    return
  }
  func.func @transform_0(%arg0: i32) -> (i32, i32) {
    %c0_i32 = arith.constant 0 : i32
    %c0_i32_0 = arith.constant 0 : i32
    return %arg0, %c0_i32 : i32, i32
  }
  func.func @transform_1(%arg0: i32) -> (i32, i32) {
    %c0_i32 = arith.constant 0 : i32
    %c0_i32_0 = arith.constant 0 : i32
    return %arg0, %c0_i32 : i32, i32
  }
}

</mosaic_0001>

<llo_original>
// kernel: tpu_custom_call.1
$region0: #{tpu_custom_call.1}
  #allocation0 [shape = 'u32[]', space=smem, size = 0x4, offset = 0x4, fixed_abs, tag = 'smem constant byte address 0x4 - core index']
  #allocation1 [shape = 'u32[72,128]{1,0:T(1,128)}', space=vmem, size = 0x9000, scoped, tag = 'internal scratch']
  %s0 = inlined_call_operand.hbm [shape: f32[8,256], index: 0, kind: input, shape index: {}, may-alias: {0,1}]
  %s1 = inlined_call_operand.hbm [shape: f32[8,256], index: 1, kind: output, shape index: {}, may-alias: {0,1}]
  %s2 = sld [smem:[#allocation0]]
  $region18: #{tpu_custom_call.1} parent=0
    _
  %s4 = ssub.s32 1, %s2
  %s5 = scalar_select 0, %s4, %s2
  $region1: #{tpu_custom_call.1} parent=0
    #allocation2 [shape = 'u8[8192]{0}', space=vmem, size = 0x2000, scoped, tag = 'input window, operand 0, single buffered']
    #allocation3 [shape = 's32[1]{0}', space=sflag, size = 0x4, scoped, tag = 'scoped memory for tpu_custom_call.1']
    #allocation4 [shape = 's32[1]{0}', space=sflag, size = 0x4, scoped, tag = 'scoped memory for tpu_custom_call.1']
    #allocation5 [shape = 'u8[8192]{0}', space=vmem, size = 0x2000, scoped, tag = 'output window, operand 0, single buffered']
    %6 = vsyncpa [#allocation3], 0
    %7 = vsyncpa [#allocation4], 0
    // Predicated region
    $region2: #{tpu_custom_call.1} parent=1 // pred_check
      _
    $region3: #{tpu_custom_call.1} parent=1 // pred_check_branch
      %9 = sbr.rel (0) target = $region5
    $region4: #{tpu_custom_call.1} parent=1 // pred_region
      %11 = vsyncadd [#allocation3], 0
      %s13 = sshll.u32 %s0, 4
      %s14 = int_to_ptr.hbm [resolvable:$true] %s13
      %s15 = sshll.u32 [#allocation2], 4
      %s16 = int_to_ptr.vmem [resolvable:$true] %s15
      %18 = dma.hbm_to_vmem [thread:$0]  %s14, 256, %s16, [#allocation3]
    $region5: #{tpu_custom_call.1} parent=1 // pred_fallthru
      _
    // Predicated region
    $region6: #{tpu_custom_call.1} parent=1 // pred_check
      _
    $region7: #{tpu_custom_call.1} parent=1 // pred_check_branch
      %20 = sbr.rel (0) target = $region9
    $region8: #{tpu_custom_call.1} parent=1 // pred_region
      %22 = dma.done [#allocation3], 256
    $region9: #{tpu_custom_call.1} parent=1 // pred_fallthru
      _
    %v23 = vld [vmem:[#allocation2] sm:$0xff]
    %v24 = vld [vmem:[#allocation2 + $0x8] sm:$0xff]
    %v25 = vmax.f32 %v23, 0.0
    %v26 = vmax.f32 %v24, 0.0
    %27 = vst [vmem:[#allocation5] sm:$0xff] %v25
    %28 = vst [vmem:[#allocation5 + $0x8] sm:$0xff] %v26
    // Predicated region
    $region10: #{tpu_custom_call.1} parent=1 // pred_check
      _
    $region11: #{tpu_custom_call.1} parent=1 // pred_check_branch
      %30 = sbr.rel (0) target = $region13
    $region12: #{tpu_custom_call.1} parent=1 // pred_region
      %32 = vsyncadd [#allocation4], 0
      %s34 = sshll.u32 [#allocation5], 4
      %s35 = int_to_ptr.vmem [resolvable:$true] %s34
      %s36 = sshll.u32 %s1, 4
      %s37 = int_to_ptr.hbm [resolvable:$true] %s36
      %39 = dma.vmem_to_hbm [thread:$0]  %s35, 256, %s37, [#allocation4]
    $region13: #{tpu_custom_call.1} parent=1 // pred_fallthru
      _
    // Predicated region
    $region14: #{tpu_custom_call.1} parent=1 // pred_check
      _
    $region15: #{tpu_custom_call.1} parent=1 // pred_check_branch
      %41 = sbr.rel (0) target = $region17
    $region16: #{tpu_custom_call.1} parent=1 // pred_region
      %43 = dma.done [#allocation4], 256
    $region17: #{tpu_custom_call.1} parent=1 // pred_fallthru
      _
    %44 = vsyncpa [#allocation3], 1
    %45 = vsyncpa [#allocation4], 1

</llo_original>
